<compile_context>
chip_gen: v5e
topology: v5e:2x2
jax: 0.10.0
libtpu: 0.0.40
codegen_flags: <defaults>
</compile_context>

<pallas_src>
import functools

import numpy as np
import jax
import jax.numpy as jnp
from jax import lax
from jax.experimental import pallas as pl
from jax.experimental.pallas import tpu as pltpu

BN_EPS = 1e-5


# ---------------------------------------------------------------------------
# Fused Pallas kernel: whole residual block, transposed (channels-on-sublanes),
# im2col built in-kernel with lane rolls over the padded flat image.
# ---------------------------------------------------------------------------
def _make_block_kernel(oc: int, c_pad: int, kh: int, kw: int, wp: int, mp: int):
    """oc: channels per branch. c_pad: sublane-padded input channels.
    wp: padded image width. mp: lane-padded flat length (N*Hp*Wp rounded to 128)."""
    # Tap (i, j) of the kh x kw conv needs xp[f + i*wp + j] at anchor f.
    # roll(x, k)[f] = x[f - k]  =>  k = (-(i*wp + j)) % mp.   (static shifts)
    shifts = [(-(i * wp + j)) % mp for i in range(kh) for j in range(kw)]

    def kernel(xp_ref, mask_ref, wa_ref, ta_ref, w2_ref, t2_ref, o_ref):
        xp = xp_ref[...]                                           # (c_pad, mp) f32

        # ---- fused im2col: build the (kh*kw*c_pad, mp) patch matrix with rolls.
        # For valid anchors the taps never wrap (the zero padding is already in xp),
        # so no masks are needed here; wrapped lanes only land on anchors the
        # wrapper slices away.
        taps = [xp if s == 0 else pltpu.roll(xp, s, axis=1) for s in shifts]
        patches = jnp.concatenate(taps, axis=0).astype(jnp.bfloat16)

        # ---- stage A: layer1-conv and shortcut-conv share the patches (one MXU pass).
        # BN scale is folded into wa; BN shift + conv bias arrives as ta (2*oc, 1).
        y_a = jnp.dot(wa_ref[...], patches, preferred_element_type=jnp.float32)
        y_a = y_a + ta_ref[...]                                    # (2*oc, mp)

        mask = mask_ref[...]                                       # (1, mp) 1/0 valid cols
        h = jnp.maximum(y_a[:oc, :], 0.0) * mask                   # layer1 ReLU + zero pad cols
        ident = y_a[oc:, :]                                        # shortcut branch (no ReLU)

        # ---- stage B: layer2 1x3 conv, padding (0,1), stride 1 — lane rolls of h.
        # The masked (invalid) columns of h supply layer2's zero padding; roll
        # wrap-around only reaches invalid anchor columns.
        h_l = pltpu.roll(h, 1, axis=1)                             # h[.., ow-1]
        h_r = pltpu.roll(h, mp - 1, axis=1)                        # h[.., ow+1]
        p_b = jnp.concatenate([h_l, h, h_r], axis=0).astype(jnp.bfloat16)  # (3*oc, mp)

        y2 = jnp.dot(w2_ref[...], p_b, preferred_element_type=jnp.float32) + t2_ref[...]
        y2 = jnp.maximum(y2, 0.0)                                  # layer2's ReLU (pre-residual)

        # residual add + final ReLU, lane-dense store
        o_ref[...] = jnp.maximum(y2 + ident, 0.0).astype(o_ref.dtype)

    return kernel


def _fused_block(xp_flat, col_mask, wa, ta, w2c, t2c, oc, c_pad, kh, kw, wp):
    """xp_flat: (c_pad, mp) f32 padded flat image; wa: (2*oc, kh*kw*c_pad) bf16;
    ta: (2*oc, 1) f32; w2c: (oc, 3*oc) bf16; t2c: (oc, 1) f32; col_mask: (1, mp) f32."""
    mp = xp_flat.shape[1]
    kernel = _make_block_kernel(oc, c_pad, kh, kw, wp, mp)

    return pl.pallas_call(
        kernel,
        out_shape=jax.ShapeDtypeStruct((oc, mp), jnp.float32),
        grid_spec=pltpu.PrefetchScalarGridSpec(
            num_scalar_prefetch=0,
            grid=(1,),                                   # single step: latency-bound problem
            in_specs=[
                pl.BlockSpec((c_pad, mp), lambda i: (0, 0)),            # padded flat image
                pl.BlockSpec((1, mp), lambda i: (0, 0)),                # valid-column mask
                pl.BlockSpec((2 * oc, kh * kw * c_pad), lambda i: (0, 0)),  # stage-A weights
                pl.BlockSpec((2 * oc, 1), lambda i: (0, 0)),            # stage-A shift
                pl.BlockSpec((oc, 3 * oc), lambda i: (0, 0)),           # layer2 weights (3 taps)
                pl.BlockSpec((oc, 1), lambda i: (0, 0)),                # layer2 shift
            ],
            out_specs=pl.BlockSpec((oc, mp), lambda i: (0, 0)),
        ),
        compiler_params=pltpu.CompilerParams(
            dimension_semantics=("arbitrary",),
        ),
    )(xp_flat, col_mask, wa, ta, w2c, t2c)


# ---------------------------------------------------------------------------
# Wrapper glue: pad + flatten input, fold BN/bias into weights
# ---------------------------------------------------------------------------
def _bn_fold(gamma, beta, mean, var, bias):
    scale = gamma / jnp.sqrt(var + BN_EPS)
    shift = (bias - mean) * scale + beta
    return scale, shift


def conv2d_shortcut_forward(x, params, stride, padding):
    """Conv2d_shortcut forward, NCHW in / NCHW out, single fused Pallas kernel."""
    n, c, h, w = x.shape
    oc, _, kh, kw = params["w1"].shape
    ph, pw = padding
    assert tuple(stride) == (1, 1), "fused roll-based im2col requires stride (1, 1)"
    assert kw >= 2  # leaves >=1 padded column between rows for the layer2 roll trick

    hp, wp = h + 2 * ph, w + 2 * pw
    oh, ow = hp - kh + 1, wp - kw + 1
    m_real = n * hp * wp
    mp = -(-m_real // 128) * 128           # lane-pad flat axis to a multiple of 128
    c_pad = -(-c // 8) * 8                 # sublane-align the per-tap channel block

    # --- padded input, channel-major, flattened: (c_pad, mp) ------------------
    x_cn = jnp.transpose(x, (1, 0, 2, 3))                                  # (C, N, H, W)
    xp = jnp.pad(x_cn, ((0, c_pad - c), (0, 0), (ph, ph), (pw, pw)))       # (c_pad,N,Hp,Wp)
    xp_flat = jnp.pad(xp.reshape(c_pad, m_real).astype(jnp.float32),
                      ((0, 0), (0, mp - m_real)))                          # (c_pad, mp)

    # --- valid-anchor-column mask (host-side constant: no runtime XLA ops) ----
    idx = np.arange(mp)
    col_mask = (((idx % wp) < ow) & (idx < m_real)).astype(np.float32).reshape(1, mp)

    # --- stage A weights: layer1 & shortcut stacked, BN scale folded in -------
    s1, t1 = _bn_fold(params["g1"], params["be1"], params["m1"], params["v1"], params["b1"])
    ssc, tsc = _bn_fold(params["g_sc"], params["be_sc"], params["m_sc"], params["v_sc"],
                        params["b_sc"])

    def fold_w(wgt, scale):                       # (oc, cin, kh, kw) -> (oc, kh*kw*c_pad)
        wt = jnp.transpose(wgt, (0, 2, 3, 1))                              # (oc, kh, kw, cin)
        wt = jnp.pad(wt, ((0, 0), (0, 0), (0, 0), (0, c_pad - c)))
        return wt.reshape(oc, kh * kw * c_pad) * scale[:, None]

    wa = jnp.concatenate([fold_w(params["w1"], s1),
                          fold_w(params["w_sc"], ssc)], axis=0).astype(jnp.bfloat16)
    ta = jnp.concatenate([t1, tsc], axis=0)[:, None].astype(jnp.float32)   # (2*oc, 1)

    # --- stage B weights: (oc, ic, 1, 3) -> columns ordered (kw, ic) ----------
    s2, t2 = _bn_fold(params["g2"], params["be2"], params["m2"], params["v2"], params["b2"])
    w2c = (params["w2"][:, :, 0, :] * s2[:, None, None]).transpose(0, 2, 1) \
        .reshape(oc, 3 * oc).astype(jnp.bfloat16)
    t2c = t2.reshape(oc, 1).astype(jnp.float32)

    out_flat = _fused_block(xp_flat, jnp.asarray(col_mask), wa, ta, w2c, t2c,
                            oc, c_pad, kh, kw, wp)                         # (oc, mp)

    # --- extract valid anchors, back to NCHW -----------------------------------
    out = out_flat[:, :m_real].reshape(oc, n, hp, wp)[:, :, :oh, :ow]
    # NOTE: a channel-major consumer could take `out` (C,N,H,W) as-is and skip this
    # transpose (it costs roughly as much as the kernel at this size).
    return jnp.transpose(out, (1, 0, 2, 3))


# ---------------------------------------------------------------------------
# Pure-JAX reference (for verification)
# ---------------------------------------------------------------------------
def _ref_conv_bn(x, w, b, g, be, m, v, stride, padding, relu):
    y = lax.conv_general_dilated(
        x, w, window_strides=stride,
        padding=[(padding[0], padding[0]), (padding[1], padding[1])],
        dimension_numbers=("NCHW", "OIHW", "NCHW"),
        precision=lax.Precision.HIGHEST)
    y = y + b[None, :, None, None]
    y = (y - m[None, :, None, None]) / jnp.sqrt(v[None, :, None, None] + BN_EPS)
    y = y * g[None, :, None, None] + be[None, :, None, None]
    return jnp.maximum(y, 0.0) if relu else y


def _ref_forward(x, p, stride, padding):
    identity = _ref_conv_bn(x, p["w_sc"], p["b_sc"], p["g_sc"], p["be_sc"],
                            p["m_sc"], p["v_sc"], stride, padding, False)
    h = _ref_conv_bn(x, p["w1"], p["b1"], p["g1"], p["be1"],
                     p["m1"], p["v1"], stride, padding, True)
    # layer2's Sequential ends with ReLU (applied before the residual add)
    y = _ref_conv_bn(h, p["w2"], p["b2"], p["g2"], p["be2"],
                     p["m2"], p["v2"], (1, 1), (0, 1), True)
    return jnp.maximum(y + identity, 0.0)


# ---------------------------------------------------------------------------
# Main
# ---------------------------------------------------------------------------
if __name__ == "__main__":
    # Module config: Conv2d_shortcut(in_channels=4, out_channels=8,
    #                                kernel_size=3, stride=1, padding=1)
    N, CIN, COUT, H, W = 2, 4, 8, 16, 16
    KH, KW = 3, 3
    STRIDE, PADDING = (1, 1), (1, 1)

    key = jax.random.PRNGKey(0)
    ks = jax.random.split(key, 20)

    def bn_params(k):
        k1, k2, k3, k4 = jax.random.split(k, 4)
        gamma = 1.0 + 0.1 * jax.random.normal(k1, (COUT,), jnp.float32)
        beta = 0.1 * jax.random.normal(k2, (COUT,), jnp.float32)
        mean = 0.1 * jax.random.normal(k3, (COUT,), jnp.float32)
        var = 0.5 + jnp.abs(jax.random.normal(k4, (COUT,), jnp.float32))
        return gamma, beta, mean, var

    g1, be1, m1, v1 = bn_params(ks[3])
    g2, be2, m2, v2 = bn_params(ks[4])
    g3, be3, m3, v3 = bn_params(ks[5])

    params = dict(
        # layer1: Conv2d(4, 8, 3, 1, 1)
        w1=0.1 * jax.random.normal(ks[0], (COUT, CIN, KH, KW), jnp.float32),
        b1=0.1 * jax.random.normal(ks[6], (COUT,), jnp.float32),
        g1=g1, be1=be1, m1=m1, v1=v1,
        # layer2: Conv2d(8, 8, (1, 3), (1, 1), (0, 1))
        w2=0.1 * jax.random.normal(ks[1], (COUT, COUT, 1, 3), jnp.float32),
        b2=0.1 * jax.random.normal(ks[7], (COUT,), jnp.float32),
        g2=g2, be2=be2, m2=m2, v2=v2,
        # shortcut: Conv2d(4, 8, 3, 1, 1)
        w_sc=0.1 * jax.random.normal(ks[2], (COUT, CIN, KH, KW), jnp.float32),
        b_sc=0.1 * jax.random.normal(ks[8], (COUT,), jnp.float32),
        g_sc=g3, be_sc=be3, m_sc=m3, v_sc=v3,
    )

    x = jax.random.normal(ks[9], (N, CIN, H, W), jnp.float32)

    fwd = jax.jit(functools.partial(conv2d_shortcut_forward,
                                    stride=STRIDE, padding=PADDING))
    out = fwd(x, params)
    out = jax.block_until_ready(out)

    ref = _ref_forward(x, params, STRIDE, PADDING)
    ref = jax.block_until_ready(ref)

    assert out.shape == (N, COUT, H, W), out.shape
    # bf16 MXU operands (f32 accumulate): 1e-2 abs tolerance per the review guidance.
    max_err = float(jnp.max(jnp.abs(out - ref)))
    assert max_err < 1e-2, f"max abs error {max_err}"

    print("KERNEL_OK")
</pallas_src>

<mosaic_0001>
module attributes {stable_mosaic.version = 11 : i64} {
  func.func @kernel(%arg0: i32, %arg1: memref<8x768xf32, #tpu.memory_space<vmem>>, %arg2: memref<1x768xf32, #tpu.memory_space<vmem>>, %arg3: memref<16x72xbf16, #tpu.memory_space<vmem>>, %arg4: memref<16x1xf32, #tpu.memory_space<vmem>>, %arg5: memref<8x24xbf16, #tpu.memory_space<vmem>>, %arg6: memref<8x1xf32, #tpu.memory_space<vmem>>, %arg7: memref<8x768xf32, #tpu.memory_space<vmem>>) attributes {dimension_semantics = [#tpu.dimension_semantics<arbitrary>], iteration_bounds = array<i64: 1>, scalar_prefetch = 0 : i64, scratch_operands = 0 : i64, tpu.core_type = #tpu.core_type<tc>, window_params = [{pipeline_mode = #tpu.pipeline_mode<synchronous>, transform_indices = @transform_0, window_bounds = array<i64: 8, 768>}, {pipeline_mode = #tpu.pipeline_mode<synchronous>, transform_indices = @transform_1, window_bounds = array<i64: 1, 768>}, {pipeline_mode = #tpu.pipeline_mode<synchronous>, transform_indices = @transform_2, window_bounds = array<i64: 16, 72>}, {pipeline_mode = #tpu.pipeline_mode<synchronous>, transform_indices = @transform_3, window_bounds = array<i64: 16, 1>}, {pipeline_mode = #tpu.pipeline_mode<synchronous>, transform_indices = @transform_4, window_bounds = array<i64: 8, 24>}, {pipeline_mode = #tpu.pipeline_mode<synchronous>, transform_indices = @transform_5, window_bounds = array<i64: 8, 1>}, {pipeline_mode = #tpu.pipeline_mode<synchronous>, transform_indices = @transform_6, window_bounds = array<i64: 8, 768>}]} {
    %c0 = arith.constant 0 : index
    %c0_0 = arith.constant 0 : index
    %0 = vector.load %arg1[%c0, %c0_0] : memref<8x768xf32, #tpu.memory_space<vmem>>, vector<8x768xf32>
    %c767_i32 = arith.constant 767 : i32
    %1 = tpu.dynamic_rotate %0 by %c767_i32 dim 1 : vector<8x768xf32>, i32 -> vector<8x768xf32>
    %c766_i32 = arith.constant 766 : i32
    %2 = tpu.dynamic_rotate %0 by %c766_i32 dim 1 : vector<8x768xf32>, i32 -> vector<8x768xf32>
    %c750_i32 = arith.constant 750 : i32
    %3 = tpu.dynamic_rotate %0 by %c750_i32 dim 1 : vector<8x768xf32>, i32 -> vector<8x768xf32>
    %c749_i32 = arith.constant 749 : i32
    %4 = tpu.dynamic_rotate %0 by %c749_i32 dim 1 : vector<8x768xf32>, i32 -> vector<8x768xf32>
    %c748_i32 = arith.constant 748 : i32
    %5 = tpu.dynamic_rotate %0 by %c748_i32 dim 1 : vector<8x768xf32>, i32 -> vector<8x768xf32>
    %c732_i32 = arith.constant 732 : i32
    %6 = tpu.dynamic_rotate %0 by %c732_i32 dim 1 : vector<8x768xf32>, i32 -> vector<8x768xf32>
    %c731_i32 = arith.constant 731 : i32
    %7 = tpu.dynamic_rotate %0 by %c731_i32 dim 1 : vector<8x768xf32>, i32 -> vector<8x768xf32>
    %c730_i32 = arith.constant 730 : i32
    %8 = tpu.dynamic_rotate %0 by %c730_i32 dim 1 : vector<8x768xf32>, i32 -> vector<8x768xf32>
    %9 = tpu.concatenate %0, %1, %2, %3, %4, %5, %6, %7, %8 in 0 : vector<8x768xf32>, vector<8x768xf32>, vector<8x768xf32>, vector<8x768xf32>, vector<8x768xf32>, vector<8x768xf32>, vector<8x768xf32>, vector<8x768xf32>, vector<8x768xf32> -> vector<72x768xf32>
    %10 = arith.truncf %9 : vector<72x768xf32> to vector<72x768xbf16>
    %c0_1 = arith.constant 0 : index
    %c0_2 = arith.constant 0 : index
    %11 = vector.load %arg3[%c0_1, %c0_2] : memref<16x72xbf16, #tpu.memory_space<vmem>>, vector<16x72xbf16>
    %cst = arith.constant dense<0.000000e+00> : vector<16x768xf32>
    %12 = tpu.matmul %11, %10, %cst {dimension_numbers = #tpu.dot_dimension_numbers<[1], [0], [0], [1], [0, 0, 1, 1], [], []>} : vector<16x72xbf16>, vector<72x768xbf16>, vector<16x768xf32> -> vector<16x768xf32>
    %c0_3 = arith.constant 0 : index
    %c0_4 = arith.constant 0 : index
    %13 = vector.load %arg4[%c0_3, %c0_4] : memref<16x1xf32, #tpu.memory_space<vmem>>, vector<16x1xf32>
    %14 = vector.broadcast %13 : vector<16x1xf32> to vector<16x768xf32>
    %15 = arith.addf %12, %14 : vector<16x768xf32>
    %c0_5 = arith.constant 0 : index
    %c0_6 = arith.constant 0 : index
    %16 = vector.load %arg2[%c0_5, %c0_6] : memref<1x768xf32, #tpu.memory_space<vmem>>, vector<1x768xf32>
    %17 = vector.extract_strided_slice %15 {offsets = [0, 0], sizes = [8, 768], strides = [1, 1]} : vector<16x768xf32> to vector<8x768xf32>
    %cst_7 = arith.constant 0.000000e+00 : f32
    %18 = vector.broadcast %cst_7 : f32 to vector<8x768xf32>
    %19 = arith.maximumf %17, %18 : vector<8x768xf32>
    %20 = vector.broadcast %16 : vector<1x768xf32> to vector<8x768xf32>
    %21 = arith.mulf %19, %20 : vector<8x768xf32>
    %22 = vector.extract_strided_slice %15 {offsets = [8, 0], sizes = [8, 768], strides = [1, 1]} : vector<16x768xf32> to vector<8x768xf32>
    %c1_i32 = arith.constant 1 : i32
    %23 = tpu.dynamic_rotate %21 by %c1_i32 dim 1 : vector<8x768xf32>, i32 -> vector<8x768xf32>
    %c767_i32_8 = arith.constant 767 : i32
    %24 = tpu.dynamic_rotate %21 by %c767_i32_8 dim 1 : vector<8x768xf32>, i32 -> vector<8x768xf32>
    %25 = tpu.concatenate %23, %21, %24 in 0 : vector<8x768xf32>, vector<8x768xf32>, vector<8x768xf32> -> vector<24x768xf32>
    %26 = arith.truncf %25 : vector<24x768xf32> to vector<24x768xbf16>
    %c0_9 = arith.constant 0 : index
    %c0_10 = arith.constant 0 : index
    %27 = vector.load %arg5[%c0_9, %c0_10] : memref<8x24xbf16, #tpu.memory_space<vmem>>, vector<8x24xbf16>
    %cst_11 = arith.constant dense<0.000000e+00> : vector<8x768xf32>
    %28 = tpu.matmul %27, %26, %cst_11 {dimension_numbers = #tpu.dot_dimension_numbers<[1], [0], [0], [1], [0, 0, 1, 1], [], []>} : vector<8x24xbf16>, vector<24x768xbf16>, vector<8x768xf32> -> vector<8x768xf32>
    %c0_12 = arith.constant 0 : index
    %c0_13 = arith.constant 0 : index
    %29 = vector.load %arg6[%c0_12, %c0_13] : memref<8x1xf32, #tpu.memory_space<vmem>>, vector<8x1xf32>
    %30 = vector.broadcast %29 : vector<8x1xf32> to vector<8x768xf32>
    %31 = arith.addf %28, %30 : vector<8x768xf32>
    %cst_14 = arith.constant 0.000000e+00 : f32
    %32 = vector.broadcast %cst_14 : f32 to vector<8x768xf32>
    %33 = arith.maximumf %31, %32 : vector<8x768xf32>
    %34 = arith.addf %33, %22 : vector<8x768xf32>
    %cst_15 = arith.constant 0.000000e+00 : f32
    %35 = vector.broadcast %cst_15 : f32 to vector<8x768xf32>
    %36 = arith.maximumf %34, %35 : vector<8x768xf32>
    %c0_16 = arith.constant 0 : index
    %c0_17 = arith.constant 0 : index
    %37 = vector.load %arg7[%c0_16, %c0_17] : memref<8x768xf32, #tpu.memory_space<vmem>>, vector<8x768xf32>
    tpu.vector_store %arg7[%c0_16, %c0_17], %36 {strides = array<i32>} : memref<8x768xf32, #tpu.memory_space<vmem>>, vector<8x768xf32>,
    return
  }
  func.func @transform_0(%arg0: i32) -> (i32, i32) {
    %c0_i32 = arith.constant 0 : i32
    %c0_i32_0 = arith.constant 0 : i32
    %c0_i32_1 = arith.constant 0 : i32
    return %c0_i32, %c0_i32_0 : i32, i32
  }
  func.func @transform_1(%arg0: i32) -> (i32, i32) {
    %c0_i32 = arith.constant 0 : i32
    %c0_i32_0 = arith.constant 0 : i32
    %c0_i32_1 = arith.constant 0 : i32
    return %c0_i32, %c0_i32_0 : i32, i32
  }
  func.func @transform_2(%arg0: i32) -> (i32, i32) {
    %c0_i32 = arith.constant 0 : i32
    %c0_i32_0 = arith.constant 0 : i32
    %c0_i32_1 = arith.constant 0 : i32
    return %c0_i32, %c0_i32_0 : i32, i32
  }
  func.func @transform_3(%arg0: i32) -> (i32, i32) {
    %c0_i32 = arith.constant 0 : i32
    %c0_i32_0 = arith.constant 0 : i32
    %c0_i32_1 = arith.constant 0 : i32
    return %c0_i32, %c0_i32_0 : i32, i32
  }
  func.func @transform_4(%arg0: i32) -> (i32, i32) {
    %c0_i32 = arith.constant 0 : i32
    %c0_i32_0 = arith.constant 0 : i32
    %c0_i32_1 = arith.constant 0 : i32
    return %c0_i32, %c0_i32_0 : i32, i32
  }
  func.func @transform_5(%arg0: i32) -> (i32, i32) {
    %c0_i32 = arith.constant 0 : i32
    %c0_i32_0 = arith.constant 0 : i32
    %c0_i32_1 = arith.constant 0 : i32
    return %c0_i32, %c0_i32_0 : i32, i32
  }
  func.func @transform_6(%arg0: i32) -> (i32, i32) {
    %c0_i32 = arith.constant 0 : i32
    %c0_i32_0 = arith.constant 0 : i32
    %c0_i32_1 = arith.constant 0 : i32
    return %c0_i32, %c0_i32_0 : i32, i32
  }
}

</mosaic_0001>

<llo_original>
// kernel: conv2d_shortcut_forward.1
$region0: #{conv2d_shortcut_forward.1}
  #allocation0 [shape = 'u32[]', space=smem, size = 0x4, offset = 0x4, fixed_abs, tag = 'smem constant byte address 0x4 - core index']
  #allocation1 [shape = 'u32[72,128]{1,0:T(1,128)}', space=vmem, size = 0x9000, scoped, tag = 'internal scratch']
  %s0 = inlined_call_operand.vmem [shape: f32[8,768], index: 0, kind: input, shape index: {}]
  %s1 = inlined_call_operand.vmem [shape: f32[1,768], index: 1, kind: input, shape index: {}]
  %s2 = inlined_call_operand.vmem [shape: bf16[16,72], index: 2, kind: input, shape index: {}]
  %s3 = inlined_call_operand.vmem [shape: f32[16,1], index: 3, kind: input, shape index: {}]
  %s4 = inlined_call_operand.vmem [shape: bf16[8,24], index: 4, kind: input, shape index: {}]
  %s5 = inlined_call_operand.vmem [shape: f32[8,1], index: 5, kind: input, shape index: {}]
  %s6 = inlined_call_operand.vmem [shape: f32[8,768], index: 6, kind: output, shape index: {}]
  %s7 = sld [smem:[#allocation0]]
  $region34: #{conv2d_shortcut_forward.1} parent=0
    _
  %s9 = ssub.s32 1, %s7
  %s10 = scalar_select 0, %s9, %s7
  // Predicated region
  $region2: #{conv2d_shortcut_forward.1} parent=0 // pred_check
    _
  $region3: #{conv2d_shortcut_forward.1} parent=0 // pred_check_branch
    %12 = sbr.rel (0) target = $region5
  $region4: #{conv2d_shortcut_forward.1} parent=0 // pred_region
    _
  $region5: #{conv2d_shortcut_forward.1} parent=0 // pred_fallthru
    _
  // Predicated region
  $region6: #{conv2d_shortcut_forward.1} parent=0 // pred_check
    _
  $region7: #{conv2d_shortcut_forward.1} parent=0 // pred_check_branch
    %14 = sbr.rel (0) target = $region9
  $region8: #{conv2d_shortcut_forward.1} parent=0 // pred_region
    _
  $region9: #{conv2d_shortcut_forward.1} parent=0 // pred_fallthru
    _
  // Predicated region
  $region10: #{conv2d_shortcut_forward.1} parent=0 // pred_check
    _
  $region11: #{conv2d_shortcut_forward.1} parent=0 // pred_check_branch
    %16 = sbr.rel (0) target = $region13
  $region12: #{conv2d_shortcut_forward.1} parent=0 // pred_region
    _
  $region13: #{conv2d_shortcut_forward.1} parent=0 // pred_fallthru
    _
  // Predicated region
  $region14: #{conv2d_shortcut_forward.1} parent=0 // pred_check
    _
  $region15: #{conv2d_shortcut_forward.1} parent=0 // pred_check_branch
    %18 = sbr.rel (0) target = $region17
  $region16: #{conv2d_shortcut_forward.1} parent=0 // pred_region
    _
  $region17: #{conv2d_shortcut_forward.1} parent=0 // pred_fallthru
    _
  // Predicated region
  $region18: #{conv2d_shortcut_forward.1} parent=0 // pred_check
    _
  $region19: #{conv2d_shortcut_forward.1} parent=0 // pred_check_branch
    %20 = sbr.rel (0) target = $region21
  $region20: #{conv2d_shortcut_forward.1} parent=0 // pred_region
    _
  $region21: #{conv2d_shortcut_forward.1} parent=0 // pred_fallthru
    _
  // Predicated region
  $region22: #{conv2d_shortcut_forward.1} parent=0 // pred_check
    _
  $region23: #{conv2d_shortcut_forward.1} parent=0 // pred_check_branch
    %22 = sbr.rel (0) target = $region25
  $region24: #{conv2d_shortcut_forward.1} parent=0 // pred_region
    _
  $region25: #{conv2d_shortcut_forward.1} parent=0 // pred_fallthru
    _
  %v24 = vld [vmem:[%s0] sm:$0xff]
  %v25 = vld [vmem:[%s0 + $0x8] sm:$0xff]
  %v26 = vld [vmem:[%s0 + $0x10] sm:$0xff]
  %v27 = vld [vmem:[%s0 + $0x18] sm:$0xff]
  %v28 = vld [vmem:[%s0 + $0x20] sm:$0xff]
  %v29 = vld [vmem:[%s0 + $0x28] sm:$0xff]
  %30 = vrot.lane.b32.xlu0 %v24, 127
  %v31 = vpop.permute.xlu0 %30
  %32 = vrot.lane.b32.xlu0 %v25, 127
  %v33 = vpop.permute.xlu0 %32
  %34 = vrot.lane.b32.xlu0 %v26, 127
  %v35 = vpop.permute.xlu0 %34
  %36 = vrot.lane.b32.xlu0 %v27, 127
  %v37 = vpop.permute.xlu0 %36
  %38 = vrot.lane.b32.xlu0 %v28, 127
  %v39 = vpop.permute.xlu0 %38
  %40 = vrot.lane.b32.xlu0 %v29, 127
  %v41 = vpop.permute.xlu0 %40
  %v42 = vlaneseq
  %v43 = vand.u32 %v42, 127
  %vm44 = vcmp.lt.s32.totalorder %v43, 127
  %v45 = vsel %vm44, %v39, %v41
  %v46 = vsel %vm44, %v37, %v39
  %v47 = vsel %vm44, %v35, %v37
  %v48 = vsel %vm44, %v33, %v35
  %v49 = vsel %vm44, %v31, %v33
  %v50 = vsel %vm44, %v41, %v31
  %51 = vrot.lane.b32.xlu0 %v24, 126
  %v52 = vpop.permute.xlu0 %51
  %53 = vrot.lane.b32.xlu0 %v25, 126
  %v54 = vpop.permute.xlu0 %53
  %55 = vrot.lane.b32.xlu0 %v26, 126
  %v56 = vpop.permute.xlu0 %55
  %57 = vrot.lane.b32.xlu0 %v27, 126
  %v58 = vpop.permute.xlu0 %57
  %59 = vrot.lane.b32.xlu0 %v28, 126
  %v60 = vpop.permute.xlu0 %59
  %61 = vrot.lane.b32.xlu0 %v29, 126
  %v62 = vpop.permute.xlu0 %61
  %vm63 = vcmp.lt.s32.totalorder %v43, 126
  %v64 = vsel %vm63, %v60, %v62
  %v65 = vsel %vm63, %v58, %v60
  %v66 = vsel %vm63, %v56, %v58
  %v67 = vsel %vm63, %v54, %v56
  %v68 = vsel %vm63, %v52, %v54
  %v69 = vsel %vm63, %v62, %v52
  %70 = vrot.lane.b32.xlu0 %v24, 110
  %v71 = vpop.permute.xlu0 %70
  %72 = vrot.lane.b32.xlu0 %v25, 110
  %v73 = vpop.permute.xlu0 %72
  %74 = vrot.lane.b32.xlu0 %v26, 110
  %v75 = vpop.permute.xlu0 %74
  %76 = vrot.lane.b32.xlu0 %v27, 110
  %v77 = vpop.permute.xlu0 %76
  %78 = vrot.lane.b32.xlu0 %v28, 110
  %v79 = vpop.permute.xlu0 %78
  %80 = vrot.lane.b32.xlu0 %v29, 110
  %v81 = vpop.permute.xlu0 %80
  %vm82 = vcmp.lt.s32.totalorder %v43, 110
  %v83 = vsel %vm82, %v79, %v81
  %v84 = vsel %vm82, %v77, %v79
  %v85 = vsel %vm82, %v75, %v77
  %v86 = vsel %vm82, %v73, %v75
  %v87 = vsel %vm82, %v71, %v73
  %v88 = vsel %vm82, %v81, %v71
  %89 = vrot.lane.b32.xlu0 %v24, 109
  %v90 = vpop.permute.xlu0 %89
  %91 = vrot.lane.b32.xlu0 %v25, 109
  %v92 = vpop.permute.xlu0 %91
  %93 = vrot.lane.b32.xlu0 %v26, 109
  %v94 = vpop.permute.xlu0 %93
  %95 = vrot.lane.b32.xlu0 %v27, 109
  %v96 = vpop.permute.xlu0 %95
  %97 = vrot.lane.b32.xlu0 %v28, 109
  %v98 = vpop.permute.xlu0 %97
  %99 = vrot.lane.b32.xlu0 %v29, 109
  %v100 = vpop.permute.xlu0 %99
  %vm101 = vcmp.lt.s32.totalorder %v43, 109
  %v102 = vsel %vm101, %v98, %v100
  %v103 = vsel %vm101, %v96, %v98
  %v104 = vsel %vm101, %v94, %v96
  %v105 = vsel %vm101, %v92, %v94
  %v106 = vsel %vm101, %v90, %v92
  %v107 = vsel %vm101, %v100, %v90
  %108 = vrot.lane.b32.xlu0 %v24, 108
  %v109 = vpop.permute.xlu0 %108
  %110 = vrot.lane.b32.xlu0 %v25, 108
  %v111 = vpop.permute.xlu0 %110
  %112 = vrot.lane.b32.xlu0 %v26, 108
  %v113 = vpop.permute.xlu0 %112
  %114 = vrot.lane.b32.xlu0 %v27, 108
  %v115 = vpop.permute.xlu0 %114
  %116 = vrot.lane.b32.xlu0 %v28, 108
  %v117 = vpop.permute.xlu0 %116
  %118 = vrot.lane.b32.xlu0 %v29, 108
  %v119 = vpop.permute.xlu0 %118
  %vm120 = vcmp.lt.s32.totalorder %v43, 108
  %v121 = vsel %vm120, %v117, %v119
  %v122 = vsel %vm120, %v115, %v117
  %v123 = vsel %vm120, %v113, %v115
  %v124 = vsel %vm120, %v111, %v113
  %v125 = vsel %vm120, %v109, %v111
  %v126 = vsel %vm120, %v119, %v109
  %127 = vrot.lane.b32.xlu0 %v24, 92
  %v128 = vpop.permute.xlu0 %127
  %129 = vrot.lane.b32.xlu0 %v25, 92
  %v130 = vpop.permute.xlu0 %129
  %131 = vrot.lane.b32.xlu0 %v26, 92
  %v132 = vpop.permute.xlu0 %131
  %133 = vrot.lane.b32.xlu0 %v27, 92
  %v134 = vpop.permute.xlu0 %133
  %135 = vrot.lane.b32.xlu0 %v28, 92
  %v136 = vpop.permute.xlu0 %135
  %137 = vrot.lane.b32.xlu0 %v29, 92
  %v138 = vpop.permute.xlu0 %137
  %vm139 = vcmp.lt.s32.totalorder %v43, 92
  %v140 = vsel %vm139, %v136, %v138
  %v141 = vsel %vm139, %v134, %v136
  %v142 = vsel %vm139, %v132, %v134
  %v143 = vsel %vm139, %v130, %v132
  %v144 = vsel %vm139, %v128, %v130
  %v145 = vsel %vm139, %v138, %v128
  %146 = vrot.lane.b32.xlu0 %v24, 91
  %v147 = vpop.permute.xlu0 %146
  %148 = vrot.lane.b32.xlu0 %v25, 91
  %v149 = vpop.permute.xlu0 %148
  %150 = vrot.lane.b32.xlu0 %v26, 91
  %v151 = vpop.permute.xlu0 %150
  %152 = vrot.lane.b32.xlu0 %v27, 91
  %v153 = vpop.permute.xlu0 %152
  %154 = vrot.lane.b32.xlu0 %v28, 91
  %v155 = vpop.permute.xlu0 %154
  %156 = vrot.lane.b32.xlu0 %v29, 91
  %v157 = vpop.permute.xlu0 %156
  %vm158 = vcmp.lt.s32.totalorder %v43, 91
  %v159 = vsel %vm158, %v155, %v157
  %v160 = vsel %vm158, %v153, %v155
  %v161 = vsel %vm158, %v151, %v153
  %v162 = vsel %vm158, %v149, %v151
  %v163 = vsel %vm158, %v147, %v149
  %v164 = vsel %vm158, %v157, %v147
  %165 = vrot.lane.b32.xlu0 %v24, 90
  %v166 = vpop.permute.xlu0 %165
  %167 = vrot.lane.b32.xlu0 %v25, 90
  %v168 = vpop.permute.xlu0 %167
  %169 = vrot.lane.b32.xlu0 %v26, 90
  %v170 = vpop.permute.xlu0 %169
  %171 = vrot.lane.b32.xlu0 %v27, 90
  %v172 = vpop.permute.xlu0 %171
  %173 = vrot.lane.b32.xlu0 %v28, 90
  %v174 = vpop.permute.xlu0 %173
  %175 = vrot.lane.b32.xlu0 %v29, 90
  %v176 = vpop.permute.xlu0 %175
  %vm177 = vcmp.lt.s32.totalorder %v43, 90
  %v178 = vsel %vm177, %v174, %v176
  %v179 = vsel %vm177, %v172, %v174
  %v180 = vsel %vm177, %v170, %v172
  %v181 = vsel %vm177, %v168, %v170
  %v182 = vsel %vm177, %v166, %v168
  %v183 = vsel %vm177, %v176, %v166
  %v184 = vpack.c.bf16 %v49, %v24
  %v185 = vpack.c.bf16 %v48, %v25
  %v186 = vpack.c.bf16 %v47, %v26
  %v187 = vpack.c.bf16 %v46, %v27
  %v188 = vpack.c.bf16 %v45, %v28
  %v189 = vpack.c.bf16 %v50, %v29
  %v190 = vpack.c.bf16 %v87, %v68
  %v191 = vpack.c.bf16 %v86, %v67
  %v192 = vpack.c.bf16 %v85, %v66
  %v193 = vpack.c.bf16 %v84, %v65
  %v194 = vpack.c.bf16 %v83, %v64
  %v195 = vpack.c.bf16 %v88, %v69
  %v196 = vpack.c.bf16 %v125, %v106
  %v197 = vpack.c.bf16 %v124, %v105
  %v198 = vpack.c.bf16 %v123, %v104
  %v199 = vpack.c.bf16 %v122, %v103
  %v200 = vpack.c.bf16 %v121, %v102
  %v201 = vpack.c.bf16 %v126, %v107
  %v202 = vpack.c.bf16 %v163, %v144
  %v203 = vpack.c.bf16 %v162, %v143
  %v204 = vpack.c.bf16 %v161, %v142
  %v205 = vpack.c.bf16 %v160, %v141
  %v206 = vpack.c.bf16 %v159, %v140
  %v207 = vpack.c.bf16 %v164, %v145
  %v208 = vpack.c.bf16 %v182, %v182
  %v209 = vpack.c.bf16 %v181, %v181
  %v210 = vpack.c.bf16 %v180, %v180
  %v211 = vpack.c.bf16 %v179, %v179
  %v212 = vpack.c.bf16 %v178, %v178
  %v213 = vpack.c.bf16 %v183, %v183
  %v214 = vld [vmem:[%s2] sm:$0xf]
  %v215 = vld [vmem:[%s2 + $0x4] sm:$0xf]
  %v216 = vld [vmem:[%s3] sm:$0xff]
  %v217 = vld [vmem:[%s3 + $0x8] sm:$0xff]
  %219 = vset.pattern.permute.xlu0 0
  %220 = vperm.xlu0 %219, %v216
  %v221 = vpop.permute.xlu0 %220
  %224 = vset.pattern.permute.xlu0 0
  %225 = vperm.xlu0 %224, %v217
  %v226 = vpop.permute.xlu0 %225
  %v230 = vunpack.c.l.b16 %v214
  %v231 = vunpack.c.l.b16 %v215
  %v232 = vpack.c.b16 %v231, %v230
  %vm233 = vcmask 588800
  %v235 = vsel %vm233, %v232, 0
  %vm237 = vcmask 1043456
  %v239 = vsel %vm237, %v208, 0
  %v242 = vsel %vm237, %v209, 0
  %v245 = vsel %vm237, %v210, 0
  %v248 = vsel %vm237, %v211, 0
  %v251 = vsel %vm237, %v212, 0
  %v254 = vsel %vm237, %v213, 0
  %256 = vmatpush.bf16.msra.mxu0 0
  %257 = vmatpush.bf16.msra.mxu0 0
  %258 = vmatpush.bf16.msra.mxu0 0
  %259 = vmatpush.bf16.msra.mxu0 %v239
  %260 = vmatpush.bf16.msra.mxu0 %v202
  %261 = vmatpush.bf16.msra.mxu0 %v196
  %262 = vmatpush.bf16.msra.mxu0 %v190
  %263 = vmatpush.bf16.msra.mxu0 %v184
  %264 = vmatmul.bf16.gmra.mxu0 %v235
  %v265 = vpop.f32.mrf.mxu0
  %v266 = vadd.f32 %v221, %v265
  %v267 = vpop.f32.mrf.mxu0
  %v268 = vadd.f32 %v226, %v267
  %269 = vdwg.mxu0
  %270 = vmatpush.bf16.msra.mxu0 0
  %271 = vmatpush.bf16.msra.mxu0 0
  %272 = vmatpush.bf16.msra.mxu0 0
  %273 = vmatpush.bf16.msra.mxu0 %v242
  %274 = vmatpush.bf16.msra.mxu0 %v203
  %275 = vmatpush.bf16.msra.mxu0 %v197
  %276 = vmatpush.bf16.msra.mxu0 %v191
  %277 = vmatpush.bf16.msra.mxu0 %v185
  %278 = vmatmul.bf16.gmra.mxu0 %v235
  %v279 = vpop.f32.mrf.mxu0
  %v280 = vadd.f32 %v221, %v279
  %v281 = vpop.f32.mrf.mxu0
  %v282 = vadd.f32 %v226, %v281
  %283 = vdwg.mxu0
  %284 = vmatpush.bf16.msra.mxu0 0
  %285 = vmatpush.bf16.msra.mxu0 0
  %286 = vmatpush.bf16.msra.mxu0 0
  %287 = vmatpush.bf16.msra.mxu0 %v245
  %288 = vmatpush.bf16.msra.mxu0 %v204
  %289 = vmatpush.bf16.msra.mxu0 %v198
  %290 = vmatpush.bf16.msra.mxu0 %v192
  %291 = vmatpush.bf16.msra.mxu0 %v186
  %292 = vmatmul.bf16.gmra.mxu0 %v235
  %v293 = vpop.f32.mrf.mxu0
  %v294 = vadd.f32 %v221, %v293
  %v295 = vpop.f32.mrf.mxu0
  %v296 = vadd.f32 %v226, %v295
  %297 = vdwg.mxu0
  %298 = vmatpush.bf16.msra.mxu0 0
  %299 = vmatpush.bf16.msra.mxu0 0
  %300 = vmatpush.bf16.msra.mxu0 0
  %301 = vmatpush.bf16.msra.mxu0 %v248
  %302 = vmatpush.bf16.msra.mxu0 %v205
  %303 = vmatpush.bf16.msra.mxu0 %v199
  %304 = vmatpush.bf16.msra.mxu0 %v193
  %305 = vmatpush.bf16.msra.mxu0 %v187
  %306 = vmatmul.bf16.gmra.mxu0 %v235
  %v307 = vpop.f32.mrf.mxu0
  %v308 = vadd.f32 %v221, %v307
  %v309 = vpop.f32.mrf.mxu0
  %v310 = vadd.f32 %v226, %v309
  %311 = vdwg.mxu0
  %312 = vmatpush.bf16.msra.mxu0 0
  %313 = vmatpush.bf16.msra.mxu0 0
  %314 = vmatpush.bf16.msra.mxu0 0
  %315 = vmatpush.bf16.msra.mxu0 %v251
  %316 = vmatpush.bf16.msra.mxu0 %v206
  %317 = vmatpush.bf16.msra.mxu0 %v200
  %318 = vmatpush.bf16.msra.mxu0 %v194
  %319 = vmatpush.bf16.msra.mxu0 %v188
  %320 = vmatmul.bf16.gmra.mxu0 %v235
  %v321 = vpop.f32.mrf.mxu0
  %v322 = vadd.f32 %v221, %v321
  %v323 = vpop.f32.mrf.mxu0
  %v324 = vadd.f32 %v226, %v323
  %325 = vdwg.mxu0
  %326 = vmatpush.bf16.msra.mxu0 0
  %327 = vmatpush.bf16.msra.mxu0 0
  %328 = vmatpush.bf16.msra.mxu0 0
  %329 = vmatpush.bf16.msra.mxu0 %v254
  %330 = vmatpush.bf16.msra.mxu0 %v207
  %331 = vmatpush.bf16.msra.mxu0 %v201
  %332 = vmatpush.bf16.msra.mxu0 %v195
  %333 = vmatpush.bf16.msra.mxu0 %v189
  %334 = vmatmul.bf16.gmra.mxu0 %v235
  %v335 = vpop.f32.mrf.mxu0
  %v336 = vadd.f32 %v221, %v335
  %v337 = vpop.f32.mrf.mxu0
  %v338 = vadd.f32 %v226, %v337
  %339 = vdwg.mxu0
  %v340 = vld [vmem:[%s1] sm:$0x3f]
  %v341 = vmax.f32 %v266, 0.0
  %v342 = vmax.f32 %v280, 0.0
  %v343 = vmax.f32 %v294, 0.0
  %v344 = vmax.f32 %v308, 0.0
  %v345 = vmax.f32 %v322, 0.0
  %v346 = vmax.f32 %v336, 0.0
  %v348 = vperm.slane %v340, 0
  %v349 = vperm.slane %v340, 1
  %v350 = vperm.slane %v340, 2
  %v351 = vperm.slane %v340, 3
  %v352 = vperm.slane %v340, 4
  %v353 = vperm.slane %v340, 5
  %v360 = vmul.f32 %v341, %v348
  %v361 = vmul.f32 %v342, %v349
  %v362 = vmul.f32 %v343, %v350
  %v363 = vmul.f32 %v344, %v351
  %v364 = vmul.f32 %v345, %v352
  %v365 = vmul.f32 %v346, %v353
  %366 = vrot.lane.b32.xlu0 %v360, 1
  %v367 = vpop.permute.xlu0 %366
  %368 = vrot.lane.b32.xlu0 %v361, 1
  %v369 = vpop.permute.xlu0 %368
  %370 = vrot.lane.b32.xlu0 %v362, 1
  %v371 = vpop.permute.xlu0 %370
  %372 = vrot.lane.b32.xlu0 %v363, 1
  %v373 = vpop.permute.xlu0 %372
  %374 = vrot.lane.b32.xlu0 %v364, 1
  %v375 = vpop.permute.xlu0 %374
  %376 = vrot.lane.b32.xlu0 %v365, 1
  %v377 = vpop.permute.xlu0 %376
  %vm378 = vcmp.lt.s32.totalorder %v43, 1
  %v379 = vsel %vm378, %v375, %v377
  %v380 = vsel %vm378, %v373, %v375
  %v381 = vsel %vm378, %v371, %v373
  %v382 = vsel %vm378, %v369, %v371
  %v383 = vsel %vm378, %v367, %v369
  %v384 = vsel %vm378, %v377, %v367
  %385 = vrot.lane.b32.xlu0 %v360, 127
  %v386 = vpop.permute.xlu0 %385
  %387 = vrot.lane.b32.xlu0 %v361, 127
  %v388 = vpop.permute.xlu0 %387
  %389 = vrot.lane.b32.xlu0 %v362, 127
  %v390 = vpop.permute.xlu0 %389
  %391 = vrot.lane.b32.xlu0 %v363, 127
  %v392 = vpop.permute.xlu0 %391
  %393 = vrot.lane.b32.xlu0 %v364, 127
  %v394 = vpop.permute.xlu0 %393
  %395 = vrot.lane.b32.xlu0 %v365, 127
  %v396 = vpop.permute.xlu0 %395
  %v397 = vsel %vm44, %v394, %v396
  %v398 = vsel %vm44, %v392, %v394
  %v399 = vsel %vm44, %v390, %v392
  %v400 = vsel %vm44, %v388, %v390
  %v401 = vsel %vm44, %v386, %v388
  %v402 = vsel %vm44, %v396, %v386
  %v403 = vpack.c.bf16 %v360, %v384
  %v404 = vpack.c.bf16 %v361, %v383
  %v405 = vpack.c.bf16 %v362, %v382
  %v406 = vpack.c.bf16 %v363, %v381
  %v407 = vpack.c.bf16 %v364, %v380
  %v408 = vpack.c.bf16 %v365, %v379
  %v409 = vpack.c.bf16 %v401, %v401
  %v410 = vpack.c.bf16 %v400, %v400
  %v411 = vpack.c.bf16 %v399, %v399
  %v412 = vpack.c.bf16 %v398, %v398
  %v413 = vpack.c.bf16 %v397, %v397
  %v414 = vpack.c.bf16 %v402, %v402
  %v415 = vld [vmem:[%s4] sm:$0xf]
  %v416 = vld [vmem:[%s5] sm:$0xff]
  %418 = vset.pattern.permute.xlu0 0
  %419 = vperm.xlu0 %418, %v416
  %v420 = vpop.permute.xlu0 %419
  %vm422 = vcmask 195584
  %v424 = vsel %vm422, %v415, 0
  %v427 = vsel %vm237, %v409, 0
  %v430 = vsel %vm237, %v410, 0
  %v433 = vsel %vm237, %v411, 0
  %v436 = vsel %vm237, %v412, 0
  %v439 = vsel %vm237, %v413, 0
  %v442 = vsel %vm237, %v414, 0
  %444 = vmatpush.bf16.msra.mxu0 0
  %445 = vmatpush.bf16.msra.mxu0 0
  %446 = vmatpush.bf16.msra.mxu0 0
  %447 = vmatpush.bf16.msra.mxu0 0
  %448 = vmatpush.bf16.msra.mxu0 0
  %449 = vmatpush.bf16.msra.mxu0 0
  %450 = vmatpush.bf16.msra.mxu0 %v427
  %451 = vmatpush.bf16.msra.mxu0 %v403
  %452 = vmatmul.bf16.gmra.mxu0 %v424
  %v453 = vpop.f32.mrf.mxu0
  %v454 = vadd.f32 %v420, %v453
  %v455 = vpop.f32.mrf.mxu0
  %456 = vdwg.mxu0
  %457 = vmatpush.bf16.msra.mxu0 0
  %458 = vmatpush.bf16.msra.mxu0 0
  %459 = vmatpush.bf16.msra.mxu0 0
  %460 = vmatpush.bf16.msra.mxu0 0
  %461 = vmatpush.bf16.msra.mxu0 0
  %462 = vmatpush.bf16.msra.mxu0 0
  %463 = vmatpush.bf16.msra.mxu0 %v430
  %464 = vmatpush.bf16.msra.mxu0 %v404
  %465 = vmatmul.bf16.gmra.mxu0 %v424
  %v466 = vpop.f32.mrf.mxu0
  %v467 = vadd.f32 %v420, %v466
  %v468 = vpop.f32.mrf.mxu0
  %469 = vdwg.mxu0
  %470 = vmatpush.bf16.msra.mxu0 0
  %471 = vmatpush.bf16.msra.mxu0 0
  %472 = vmatpush.bf16.msra.mxu0 0
  %473 = vmatpush.bf16.msra.mxu0 0
  %474 = vmatpush.bf16.msra.mxu0 0
  %475 = vmatpush.bf16.msra.mxu0 0
  %476 = vmatpush.bf16.msra.mxu0 %v433
  %477 = vmatpush.bf16.msra.mxu0 %v405
  %478 = vmatmul.bf16.gmra.mxu0 %v424
  %v479 = vpop.f32.mrf.mxu0
  %v480 = vadd.f32 %v420, %v479
  %v481 = vpop.f32.mrf.mxu0
  %482 = vdwg.mxu0
  %483 = vmatpush.bf16.msra.mxu0 0
  %484 = vmatpush.bf16.msra.mxu0 0
  %485 = vmatpush.bf16.msra.mxu0 0
  %486 = vmatpush.bf16.msra.mxu0 0
  %487 = vmatpush.bf16.msra.mxu0 0
  %488 = vmatpush.bf16.msra.mxu0 0
  %489 = vmatpush.bf16.msra.mxu0 %v436
  %490 = vmatpush.bf16.msra.mxu0 %v406
  %491 = vmatmul.bf16.gmra.mxu0 %v424
  %v492 = vpop.f32.mrf.mxu0
  %v493 = vadd.f32 %v420, %v492
  %v494 = vpop.f32.mrf.mxu0
  %495 = vdwg.mxu0
  %496 = vmatpush.bf16.msra.mxu0 0
  %497 = vmatpush.bf16.msra.mxu0 0
  %498 = vmatpush.bf16.msra.mxu0 0
  %499 = vmatpush.bf16.msra.mxu0 0
  %500 = vmatpush.bf16.msra.mxu0 0
  %501 = vmatpush.bf16.msra.mxu0 0
  %502 = vmatpush.bf16.msra.mxu0 %v439
  %503 = vmatpush.bf16.msra.mxu0 %v407
  %504 = vmatmul.bf16.gmra.mxu0 %v424
  %v505 = vpop.f32.mrf.mxu0
  %v506 = vadd.f32 %v420, %v505
  %v507 = vpop.f32.mrf.mxu0
  %508 = vdwg.mxu0
  %509 = vmatpush.bf16.msra.mxu0 0
  %510 = vmatpush.bf16.msra.mxu0 0
  %511 = vmatpush.bf16.msra.mxu0 0
  %512 = vmatpush.bf16.msra.mxu0 0
  %513 = vmatpush.bf16.msra.mxu0 0
  %514 = vmatpush.bf16.msra.mxu0 0
  %515 = vmatpush.bf16.msra.mxu0 %v442
  %516 = vmatpush.bf16.msra.mxu0 %v408
  %517 = vmatmul.bf16.gmra.mxu0 %v424
  %v518 = vpop.f32.mrf.mxu0
  %v519 = vadd.f32 %v420, %v518
  %v520 = vpop.f32.mrf.mxu0
  %521 = vdwg.mxu0
  %v522 = vmax.f32 %v454, 0.0
  %v523 = vmax.f32 %v467, 0.0
  %v524 = vmax.f32 %v480, 0.0
  %v525 = vmax.f32 %v493, 0.0
  %v526 = vmax.f32 %v506, 0.0
  %v527 = vmax.f32 %v519, 0.0
  %v528 = vadd.f32 %v522, %v268
  %v529 = vadd.f32 %v523, %v282
  %v530 = vadd.f32 %v524, %v296
  %v531 = vadd.f32 %v525, %v310
  %v532 = vadd.f32 %v526, %v324
  %v533 = vadd.f32 %v527, %v338
  %v534 = vmax.f32 %v528, 0.0
  %v535 = vmax.f32 %v529, 0.0
  %v536 = vmax.f32 %v530, 0.0
  %v537 = vmax.f32 %v531, 0.0
  %v538 = vmax.f32 %v532, 0.0
  %v539 = vmax.f32 %v533, 0.0
  %540 = vst [vmem:[%s6] sm:$0xff] %v534
  %541 = vst [vmem:[%s6 + $0x8] sm:$0xff] %v535
  %542 = vst [vmem:[%s6 + $0x10] sm:$0xff] %v536
  %543 = vst [vmem:[%s6 + $0x18] sm:$0xff] %v537
  %544 = vst [vmem:[%s6 + $0x20] sm:$0xff] %v538
  %545 = vst [vmem:[%s6 + $0x28] sm:$0xff] %v539
  // Predicated region
  $region26: #{conv2d_shortcut_forward.1} parent=0 // pred_check
    _
  $region27: #{conv2d_shortcut_forward.1} parent=0 // pred_check_branch
    %547 = sbr.rel (0) target = $region29
  $region28: #{conv2d_shortcut_forward.1} parent=0 // pred_region
    _
  $region29: #{conv2d_shortcut_forward.1} parent=0 // pred_fallthru
    _
  // Predicated region
  $region30: #{conv2d_shortcut_forward.1} parent=0 // pred_check
    _
  $region31: #{conv2d_shortcut_forward.1} parent=0 // pred_check_branch
    %549 = sbr.rel (0) target = $region33
  $region32: #{conv2d_shortcut_forward.1} parent=0 // pred_region
    _
  $region33: #{conv2d_shortcut_forward.1} parent=0 // pred_fallthru
    _

</llo_original>
